<compile_context>
chip_gen: v5e
topology: v5e:2x2
jax: 0.10.0
libtpu: 0.0.40
codegen_flags: <defaults>
</compile_context>

<pallas_src>
import jax
import jax.numpy as jnp
from jax.experimental import pallas as pl
from jax.experimental.pallas import tpu as pltpu

LANE = 128      # f32 lane width
SUBLANE = 8     # f32 sublane width


def _round_up(n, m):
    return ((n + m - 1) // m) * m


def classnet_kernel(x_ref, w1_ref, b1_ref, w2_ref, b2_ref, w3_ref, b3_ref, o_ref):
    """Fused 3-layer MLP for one batch tile: (Linear+ReLU)x2 -> Linear.

    x_ref:  (TB, F)        f32   (cast to bf16 in-kernel, hidden under DMA)
    w*_ref: (in, out)      bf16  (VMEM-resident across all grid steps)
    b*_ref: (1, out)       f32
    o_ref:  (TB, N_pad)    out_dtype (lane-dense: N_pad multiple of 128)
    """
    # in-kernel f32 -> bf16 cast: free VPU work in a memory-bound kernel,
    # saves a whole separate XLA pass over x in HBM.
    x = x_ref[...].astype(w1_ref.dtype)

    # layer0 + act0 : bf16 MXU matmul, f32 accumulate, f32 bias/ReLU epilogue
    h1 = jnp.dot(x, w1_ref[...], preferred_element_type=jnp.float32) + b1_ref[...]
    h1 = jnp.maximum(h1, 0.0)

    # layer1 + act1 : cast to bf16 only right before the matmul
    h2 = jnp.dot(h1.astype(w2_ref.dtype), w2_ref[...],
                 preferred_element_type=jnp.float32) + b2_ref[...]
    h2 = jnp.maximum(h2, 0.0)

    # layer2 (output head, padded to lane-dense width; no activation)
    out = jnp.dot(h2.astype(w3_ref.dtype), w3_ref[...],
                  preferred_element_type=jnp.float32) + b3_ref[...]
    o_ref[...] = out.astype(o_ref.dtype)


def _vmem_tile_budget_and_limit():
    """(per-step tile-working-set budget, explicit vmem_limit_bytes).

    Generation-aware: physical VMEM is 128 MiB on v5e/v6e and 64 MiB per TC on
    v7x.  The tile budget uses ~1/4 of physical (capped at 24 MiB), the scoped
    VMEM limit is raised to ~1/2 of physical (capped at 64 MiB) so large tiles
    compile on v5e (16 MiB default scoped) / v6e without ever exceeding v7x.
    """
    try:
        phys = pltpu.get_tpu_info().vmem_capacity_bytes
    except Exception:  # conservative fallback if the query is unavailable
        phys = 64 << 20
    budget = min(phys // 4, 24 << 20)
    vmem_limit = min(phys // 2, 64 << 20)
    return budget, vmem_limit


def _pick_batch_tile(B, F, h1_dim, h2_dim, n_pad, block_b, budget):
    """Largest batch tile (multiple of 8) whose working set fits the budget."""
    # per-row VMEM estimate (bytes): double-buffered f32 x tile +
    # double-buffered f32 out tile + f32/bf16 temporaries for x/h1/h2/out.
    per_row = (2 * F * 4 + 2 * n_pad * 4
               + F * 2 + h1_dim * (4 + 2) + h2_dim * (4 + 2) + n_pad * 4)
    tb_cap = max(SUBLANE, (budget // per_row) // SUBLANE * SUBLANE)
    tb = min(block_b, tb_cap, _round_up(B, SUBLANE))
    tb = _round_up(max(tb, SUBLANE), SUBLANE)
    # Keep >= 2 grid steps on big batches so the "parallel" batch axis can be
    # sharded across v7x's 2 TensorCores (harmless on 1-TC v5e/v6e).
    if B >= 2048 and tb >= B:
        tb = _round_up(pl.cdiv(B, 2), SUBLANE)
    return tb


def classnet_forward(x, params, *, block_b=4096, out_dtype=jnp.float32):
    """Fused ClassNet forward as a single batch-gridded pallas_call.

    x:      (B, featureNum) float32
    params: dict with w1,b1,w2,b2,w3,b3 (weights stored (in, out); biases (1, out))
    """
    w1, b1 = params["w1"], params["b1"]
    w2, b2 = params["w2"], params["b2"]
    w3, b3 = params["w3"], params["b3"]
    B, F = x.shape
    h1_dim, h2_dim = w1.shape[1], w2.shape[1]
    out_num = w3.shape[1]

    # ---- lane-dense output head: pad last layer to a multiple of 128 lanes ----
    n_pad = _round_up(max(out_num, LANE), LANE)
    if n_pad != out_num:
        w3 = jnp.pad(w3, ((0, 0), (0, n_pad - out_num)))
        b3 = jnp.pad(b3, ((0, 0), (0, n_pad - out_num)))

    # ---- generation-aware batch tiling; no jnp.pad copy of x (partial block) ----
    budget, vmem_limit = _vmem_tile_budget_and_limit()
    tb = _pick_batch_tile(B, F, h1_dim, h2_dim, n_pad, block_b, budget)
    grid_b = pl.cdiv(B, tb)

    # ---- bf16 MXU weights, f32 biases; x stays f32 (cast happens in-kernel) ----
    x_f = x.astype(jnp.float32)
    w1_bf = w1.astype(jnp.bfloat16)
    w2_bf = w2.astype(jnp.bfloat16)
    w3_bf = w3.astype(jnp.bfloat16)
    b1_f = b1.astype(jnp.float32)
    b2_f = b2.astype(jnp.float32)
    b3_f = b3.astype(jnp.float32)

    flops = 2 * B * (F * h1_dim + h1_dim * h2_dim + h2_dim * n_pad)
    bytes_accessed = (
        x_f.size * 4
        + (w1_bf.size + w2_bf.size + w3_bf.size) * 2
        + (b1_f.size + b2_f.size + b3_f.size) * 4
        + B * n_pad * jnp.dtype(out_dtype).itemsize
    )

    out_padded = pl.pallas_call(
        classnet_kernel,
        out_shape=jax.ShapeDtypeStruct((B, n_pad), out_dtype),
        grid=(grid_b,),
        in_specs=[
            pl.BlockSpec((tb, F), lambda i: (i, 0)),        # x tile, pipelined
            pl.BlockSpec(w1_bf.shape, lambda i: (0, 0)),    # weights/biases:
            pl.BlockSpec(b1_f.shape, lambda i: (0, 0)),     # constant index ->
            pl.BlockSpec(w2_bf.shape, lambda i: (0, 0)),    # VMEM-resident
            pl.BlockSpec(b2_f.shape, lambda i: (0, 0)),
            pl.BlockSpec(w3_bf.shape, lambda i: (0, 0)),
            pl.BlockSpec(b3_f.shape, lambda i: (0, 0)),
        ],
        out_specs=pl.BlockSpec((tb, n_pad), lambda i: (i, 0)),
        compiler_params=pltpu.CompilerParams(
            dimension_semantics=("parallel",),
            vmem_limit_bytes=vmem_limit),
        cost_estimate=pl.CostEstimate(
            flops=flops, transcendentals=0, bytes_accessed=bytes_accessed),
    )(x_f, w1_bf, b1_f, w2_bf, b2_f, w3_bf, b3_f)

    # slice away only lane padding (no batch padding was ever materialized)
    return out_padded[:, :out_num]


def init_classnet_params(key, feature_num, hidden_list, output_num=2):
    """Deterministic init mimicking nn.Linear default (U(-1/sqrt(fan_in), +...))."""
    dims = [feature_num] + list(hidden_list) + [output_num]
    params = {}
    names = ["1", "2", "3"]
    for idx, (fan_in, fan_out) in enumerate(zip(dims[:-1], dims[1:])):
        key, kw, kb = jax.random.split(key, 3)
        bound = 1.0 / jnp.sqrt(fan_in)
        # stored as (in, out) -> matmul-friendly layout (PyTorch (out,in) transposed)
        params["w" + names[idx]] = jax.random.uniform(
            kw, (fan_in, fan_out), jnp.float32, -bound, bound)
        params["b" + names[idx]] = jax.random.uniform(
            kb, (1, fan_out), jnp.float32, -bound, bound)
    return params


def classnet_ref_mixed(x, params):
    """Pure-JAX reference mimicking the kernel numerics (bf16 matmul, f32 acc)."""
    def lin(h, w, b):
        return jnp.dot(h.astype(jnp.bfloat16), w.astype(jnp.bfloat16),
                       preferred_element_type=jnp.float32) + b
    h = jnp.maximum(lin(x, params["w1"], params["b1"]), 0.0)
    h = jnp.maximum(lin(h, params["w2"], params["b2"]), 0.0)
    return lin(h, params["w3"], params["b3"])


def classnet_ref_f32(x, params):
    """Full-f32 reference (same semantics as the PyTorch module)."""
    h = jnp.maximum(x @ params["w1"] + params["b1"], 0.0)
    h = jnp.maximum(h @ params["w2"] + params["b2"], 0.0)
    return h @ params["w3"] + params["b3"]


if __name__ == "__main__":
    # Small shapes consistent with ClassNet(featureNum, hiddenList, outputNum=2)
    feature_num = 32
    hidden_list = [64, 32]
    output_num = 2

    key = jax.random.PRNGKey(0)
    key, kp = jax.random.split(key)
    params = init_classnet_params(kp, feature_num, hidden_list, output_num)

    # --- case 1: tiny batch (single grid step, exact block) ---
    key, kx = jax.random.split(key)
    x_small = jax.random.normal(kx, (8, feature_num), jnp.float32)
    out_small = jax.block_until_ready(classnet_forward(x_small, params))
    assert out_small.shape == (8, output_num), out_small.shape
    ref_small = classnet_ref_mixed(x_small, params)
    assert jnp.allclose(out_small, ref_small, atol=1e-3, rtol=1e-3), \
        "mismatch vs mixed-precision reference (small batch)"
    assert jnp.allclose(out_small, classnet_ref_f32(x_small, params),
                        atol=5e-2, rtol=5e-2), "mismatch vs f32 reference (small batch)"

    # --- case 2: batch not a multiple of 8 (exercises partial-block read/write) ---
    key, kx2 = jax.random.split(key)
    x_big = jax.random.normal(kx2, (300, feature_num), jnp.float32)
    out_big = jax.block_until_ready(classnet_forward(x_big, params))
    assert out_big.shape == (300, output_num), out_big.shape
    ref_big = classnet_ref_mixed(x_big, params)
    assert jnp.allclose(out_big, ref_big, atol=1e-3, rtol=1e-3), \
        "mismatch vs mixed-precision reference (partial-block batch)"

    print("KERNEL_OK")
</pallas_src>

<mosaic_0001>
module attributes {stable_mosaic.version = 11 : i64} {
  func.func @classnet_kernel(%arg0: i32, %arg1: memref<8x32xf32, #tpu.memory_space<vmem>>, %arg2: memref<32x64xbf16, #tpu.memory_space<vmem>>, %arg3: memref<1x64xf32, #tpu.memory_space<vmem>>, %arg4: memref<64x32xbf16, #tpu.memory_space<vmem>>, %arg5: memref<1x32xf32, #tpu.memory_space<vmem>>, %arg6: memref<32x128xbf16, #tpu.memory_space<vmem>>, %arg7: memref<1x128xf32, #tpu.memory_space<vmem>>, %arg8: memref<8x128xf32, #tpu.memory_space<vmem>>) attributes {dimension_semantics = [#tpu.dimension_semantics<parallel>], iteration_bounds = array<i64: 1>, scalar_prefetch = 0 : i64, scratch_operands = 0 : i64, tpu.core_type = #tpu.core_type<tc>, window_params = [{transform_indices = @transform_0, window_bounds = array<i64: 8, 32>}, {pipeline_mode = #tpu.pipeline_mode<synchronous>, transform_indices = @transform_1, window_bounds = array<i64: 32, 64>}, {pipeline_mode = #tpu.pipeline_mode<synchronous>, transform_indices = @transform_2, window_bounds = array<i64: 1, 64>}, {pipeline_mode = #tpu.pipeline_mode<synchronous>, transform_indices = @transform_3, window_bounds = array<i64: 64, 32>}, {pipeline_mode = #tpu.pipeline_mode<synchronous>, transform_indices = @transform_4, window_bounds = array<i64: 1, 32>}, {pipeline_mode = #tpu.pipeline_mode<synchronous>, transform_indices = @transform_5, window_bounds = array<i64: 32, 128>}, {pipeline_mode = #tpu.pipeline_mode<synchronous>, transform_indices = @transform_6, window_bounds = array<i64: 1, 128>}, {transform_indices = @transform_7, window_bounds = array<i64: 8, 128>}]} {
    %c0 = arith.constant 0 : index
    %c0_0 = arith.constant 0 : index
    %0 = vector.load %arg1[%c0, %c0_0] : memref<8x32xf32, #tpu.memory_space<vmem>>, vector<8x32xf32>
    %1 = arith.truncf %0 : vector<8x32xf32> to vector<8x32xbf16>
    %c0_1 = arith.constant 0 : index
    %c0_2 = arith.constant 0 : index
    %2 = vector.load %arg2[%c0_1, %c0_2] : memref<32x64xbf16, #tpu.memory_space<vmem>>, vector<32x64xbf16>
    %cst = arith.constant dense<0.000000e+00> : vector<8x64xf32>
    %3 = tpu.matmul %1, %2, %cst {dimension_numbers = #tpu.dot_dimension_numbers<[1], [0], [0], [1], [0, 0, 1, 1], [], []>} : vector<8x32xbf16>, vector<32x64xbf16>, vector<8x64xf32> -> vector<8x64xf32>
    %c0_3 = arith.constant 0 : index
    %c0_4 = arith.constant 0 : index
    %4 = vector.load %arg3[%c0_3, %c0_4] : memref<1x64xf32, #tpu.memory_space<vmem>>, vector<1x64xf32>
    %5 = vector.broadcast %4 : vector<1x64xf32> to vector<8x64xf32>
    %6 = arith.addf %3, %5 : vector<8x64xf32>
    %cst_5 = arith.constant 0.000000e+00 : f32
    %7 = vector.broadcast %cst_5 : f32 to vector<8x64xf32>
    %8 = arith.maximumf %6, %7 : vector<8x64xf32>
    %9 = arith.truncf %8 : vector<8x64xf32> to vector<8x64xbf16>
    %c0_6 = arith.constant 0 : index
    %c0_7 = arith.constant 0 : index
    %10 = vector.load %arg4[%c0_6, %c0_7] : memref<64x32xbf16, #tpu.memory_space<vmem>>, vector<64x32xbf16>
    %cst_8 = arith.constant dense<0.000000e+00> : vector<8x32xf32>
    %11 = tpu.matmul %9, %10, %cst_8 {dimension_numbers = #tpu.dot_dimension_numbers<[1], [0], [0], [1], [0, 0, 1, 1], [], []>} : vector<8x64xbf16>, vector<64x32xbf16>, vector<8x32xf32> -> vector<8x32xf32>
    %c0_9 = arith.constant 0 : index
    %c0_10 = arith.constant 0 : index
    %12 = vector.load %arg5[%c0_9, %c0_10] : memref<1x32xf32, #tpu.memory_space<vmem>>, vector<1x32xf32>
    %13 = vector.broadcast %12 : vector<1x32xf32> to vector<8x32xf32>
    %14 = arith.addf %11, %13 : vector<8x32xf32>
    %cst_11 = arith.constant 0.000000e+00 : f32
    %15 = vector.broadcast %cst_11 : f32 to vector<8x32xf32>
    %16 = arith.maximumf %14, %15 : vector<8x32xf32>
    %17 = arith.truncf %16 : vector<8x32xf32> to vector<8x32xbf16>
    %c0_12 = arith.constant 0 : index
    %c0_13 = arith.constant 0 : index
    %18 = vector.load %arg6[%c0_12, %c0_13] : memref<32x128xbf16, #tpu.memory_space<vmem>>, vector<32x128xbf16>
    %cst_14 = arith.constant dense<0.000000e+00> : vector<8x128xf32>
    %19 = tpu.matmul %17, %18, %cst_14 {dimension_numbers = #tpu.dot_dimension_numbers<[1], [0], [0], [1], [0, 0, 1, 1], [], []>} : vector<8x32xbf16>, vector<32x128xbf16>, vector<8x128xf32> -> vector<8x128xf32>
    %c0_15 = arith.constant 0 : index
    %c0_16 = arith.constant 0 : index
    %20 = vector.load %arg7[%c0_15, %c0_16] : memref<1x128xf32, #tpu.memory_space<vmem>>, vector<1x128xf32>
    %21 = vector.broadcast %20 : vector<1x128xf32> to vector<8x128xf32>
    %22 = arith.addf %19, %21 : vector<8x128xf32>
    %c0_17 = arith.constant 0 : index
    %c0_18 = arith.constant 0 : index
    %23 = vector.load %arg8[%c0_17, %c0_18] : memref<8x128xf32, #tpu.memory_space<vmem>>, vector<8x128xf32>
    tpu.vector_store %arg8[%c0_17, %c0_18], %22 {strides = array<i32>} : memref<8x128xf32, #tpu.memory_space<vmem>>, vector<8x128xf32>,
    return
  }
  func.func @transform_0(%arg0: i32) -> (i32, i32) {
    %c0_i32 = arith.constant 0 : i32
    %c0_i32_0 = arith.constant 0 : i32
    return %arg0, %c0_i32 : i32, i32
  }
  func.func @transform_1(%arg0: i32) -> (i32, i32) {
    %c0_i32 = arith.constant 0 : i32
    %c0_i32_0 = arith.constant 0 : i32
    %c0_i32_1 = arith.constant 0 : i32
    return %c0_i32, %c0_i32_0 : i32, i32
  }
  func.func @transform_2(%arg0: i32) -> (i32, i32) {
    %c0_i32 = arith.constant 0 : i32
    %c0_i32_0 = arith.constant 0 : i32
    %c0_i32_1 = arith.constant 0 : i32
    return %c0_i32, %c0_i32_0 : i32, i32
  }
  func.func @transform_3(%arg0: i32) -> (i32, i32) {
    %c0_i32 = arith.constant 0 : i32
    %c0_i32_0 = arith.constant 0 : i32
    %c0_i32_1 = arith.constant 0 : i32
    return %c0_i32, %c0_i32_0 : i32, i32
  }
  func.func @transform_4(%arg0: i32) -> (i32, i32) {
    %c0_i32 = arith.constant 0 : i32
    %c0_i32_0 = arith.constant 0 : i32
    %c0_i32_1 = arith.constant 0 : i32
    return %c0_i32, %c0_i32_0 : i32, i32
  }
  func.func @transform_5(%arg0: i32) -> (i32, i32) {
    %c0_i32 = arith.constant 0 : i32
    %c0_i32_0 = arith.constant 0 : i32
    %c0_i32_1 = arith.constant 0 : i32
    return %c0_i32, %c0_i32_0 : i32, i32
  }
  func.func @transform_6(%arg0: i32) -> (i32, i32) {
    %c0_i32 = arith.constant 0 : i32
    %c0_i32_0 = arith.constant 0 : i32
    %c0_i32_1 = arith.constant 0 : i32
    return %c0_i32, %c0_i32_0 : i32, i32
  }
  func.func @transform_7(%arg0: i32) -> (i32, i32) {
    %c0_i32 = arith.constant 0 : i32
    %c0_i32_0 = arith.constant 0 : i32
    return %arg0, %c0_i32 : i32, i32
  }
}

</mosaic_0001>

<llo_original>
// kernel: tpu_custom_call.1
$region0: #{tpu_custom_call.1}
  #allocation0 [shape = 'u32[]', space=smem, size = 0x4, offset = 0x4, fixed_abs, tag = 'smem constant byte address 0x4 - core index']
  #allocation1 [shape = 'u32[72,128]{1,0:T(1,128)}', space=vmem, size = 0x9000, scoped, tag = 'internal scratch']
  %s0 = inlined_call_operand.vmem [shape: f32[8,32], index: 0, kind: input, shape index: {}]
  %s1 = inlined_call_operand.vmem [shape: bf16[32,64], index: 1, kind: input, shape index: {}]
  %s2 = inlined_call_operand.vmem [shape: f32[1,64], index: 2, kind: input, shape index: {}]
  %s3 = inlined_call_operand.vmem [shape: bf16[64,32], index: 3, kind: input, shape index: {}]
  %s4 = inlined_call_operand.vmem [shape: f32[1,32], index: 4, kind: input, shape index: {}]
  %s5 = inlined_call_operand.vmem [shape: bf16[32,128], index: 5, kind: input, shape index: {}]
  %s6 = inlined_call_operand.vmem [shape: f32[1,128], index: 6, kind: input, shape index: {}]
  %s7 = inlined_call_operand.hbm [shape: f32[8,128], index: 7, kind: output, shape index: {}]
  %s8 = sld [smem:[#allocation0]]
  $region38: #{tpu_custom_call.1} parent=0
    _
  %s10 = ssub.s32 1, %s8
  %s11 = scalar_select 0, %s10, %s8
  $region1: #{tpu_custom_call.1} parent=0
    #allocation2 [shape = 'u8[4096]{0}', space=vmem, size = 0x1000, scoped, tag = 'output window, operand 0, single buffered']
    #allocation3 [shape = 's32[1]{0}', space=sflag, size = 0x4, scoped, tag = 'scoped memory for tpu_custom_call.1']
    %12 = vsyncpa [#allocation3], 0
    // Predicated region
    $region2: #{tpu_custom_call.1} parent=1 // pred_check
      _
    $region3: #{tpu_custom_call.1} parent=1 // pred_check_branch
      %14 = sbr.rel (0) target = $region5
    $region4: #{tpu_custom_call.1} parent=1 // pred_region
      _
    $region5: #{tpu_custom_call.1} parent=1 // pred_fallthru
      _
    // Predicated region
    $region6: #{tpu_custom_call.1} parent=1 // pred_check
      _
    $region7: #{tpu_custom_call.1} parent=1 // pred_check_branch
      %16 = sbr.rel (0) target = $region9
    $region8: #{tpu_custom_call.1} parent=1 // pred_region
      _
    $region9: #{tpu_custom_call.1} parent=1 // pred_fallthru
      _
    // Predicated region
    $region10: #{tpu_custom_call.1} parent=1 // pred_check
      _
    $region11: #{tpu_custom_call.1} parent=1 // pred_check_branch
      %18 = sbr.rel (0) target = $region13
    $region12: #{tpu_custom_call.1} parent=1 // pred_region
      _
    $region13: #{tpu_custom_call.1} parent=1 // pred_fallthru
      _
    // Predicated region
    $region14: #{tpu_custom_call.1} parent=1 // pred_check
      _
    $region15: #{tpu_custom_call.1} parent=1 // pred_check_branch
      %20 = sbr.rel (0) target = $region17
    $region16: #{tpu_custom_call.1} parent=1 // pred_region
      _
    $region17: #{tpu_custom_call.1} parent=1 // pred_fallthru
      _
    // Predicated region
    $region18: #{tpu_custom_call.1} parent=1 // pred_check
      _
    $region19: #{tpu_custom_call.1} parent=1 // pred_check_branch
      %22 = sbr.rel (0) target = $region21
    $region20: #{tpu_custom_call.1} parent=1 // pred_region
      _
    $region21: #{tpu_custom_call.1} parent=1 // pred_fallthru
      _
    // Predicated region
    $region22: #{tpu_custom_call.1} parent=1 // pred_check
      _
    $region23: #{tpu_custom_call.1} parent=1 // pred_check_branch
      %24 = sbr.rel (0) target = $region25
    $region24: #{tpu_custom_call.1} parent=1 // pred_region
      _
    $region25: #{tpu_custom_call.1} parent=1 // pred_fallthru
      _
    // Predicated region
    $region26: #{tpu_custom_call.1} parent=1 // pred_check
      _
    $region27: #{tpu_custom_call.1} parent=1 // pred_check_branch
      %26 = sbr.rel (0) target = $region29
    $region28: #{tpu_custom_call.1} parent=1 // pred_region
      _
    $region29: #{tpu_custom_call.1} parent=1 // pred_fallthru
      _
    %v28 = vld [vmem:[%s0] sm:$0xff]
    %v29 = vpack.c.bf16 %v28, %v28
    %v30 = vld [vmem:[%s1] sm:$0xf]
    %v31 = vld [vmem:[%s1 + $0x4] sm:$0xf]
    %v32 = vld [vmem:[%s1 + $0x8] sm:$0xf]
    %v33 = vld [vmem:[%s1 + $0xc] sm:$0xf]
    %v34 = vld [vmem:[%s2] sm:$0x1]
    %v36 = vperm.slane %v34, 0
    %v42 = vunpack.c.l.b16 %v30
    %v43 = vunpack.c.l.b16 %v31
    %v44 = vunpack.c.l.b16 %v32
    %v45 = vunpack.c.l.b16 %v33
    %v46 = vpack.c.b16 %v43, %v42
    %v47 = vpack.c.b16 %v45, %v44
    %vm50 = vcmask 261120
    %v52 = vsel %vm50, %v29, 0
    %54 = vmatpush.bf16.msra.mxu0 0
    %55 = vmatpush.bf16.msra.mxu0 0
    %56 = vmatpush.bf16.msra.mxu0 0
    %57 = vmatpush.bf16.msra.mxu0 0
    %58 = vmatpush.bf16.msra.mxu0 0
    %59 = vmatpush.bf16.msra.mxu0 0
    %60 = vmatpush.bf16.msra.mxu0 %v47
    %61 = vmatpush.bf16.msra.mxu0 %v46
    %62 = vmatmul.bf16.gmra.mxu0 %v52
    %v63 = vpop.f32.mrf.mxu0
    %v64 = vadd.f32 %v36, %v63
    %v65 = vpop.f32.mrf.mxu0
    %66 = vdwg.mxu0
    %v67 = vmax.f32 %v64, 0.0
    %v68 = vpack.c.bf16 %v67, %v67
    %v69 = vld [vmem:[%s3] sm:$0xf]
    %v70 = vld [vmem:[%s3 + $0x4] sm:$0xf]
    %v71 = vld [vmem:[%s3 + $0x8] sm:$0xf]
    %v72 = vld [vmem:[%s3 + $0xc] sm:$0xf]
    %v73 = vld [vmem:[%s3 + $0x10] sm:$0xf]
    %v74 = vld [vmem:[%s3 + $0x14] sm:$0xf]
    %v75 = vld [vmem:[%s3 + $0x18] sm:$0xf]
    %v76 = vld [vmem:[%s3 + $0x1c] sm:$0xf]
    %v77 = vld [vmem:[%s4] sm:$0x1]
    %v79 = vperm.slane %v77, 0
    %v89 = vunpack.c.l.b16 %v69
    %v90 = vunpack.c.l.b16 %v70
    %v91 = vunpack.c.l.b16 %v71
    %v92 = vunpack.c.l.b16 %v72
    %v93 = vunpack.c.l.b16 %v73
    %v94 = vunpack.c.l.b16 %v74
    %v95 = vunpack.c.l.b16 %v75
    %v96 = vunpack.c.l.b16 %v76
    %v97 = vpack.c.b16 %v90, %v89
    %v98 = vpack.c.b16 %v92, %v91
    %v99 = vpack.c.b16 %v94, %v93
    %v100 = vpack.c.b16 %v96, %v95
    %vm105 = vcmask 523264
    %v107 = vsel %vm105, %v68, 0
    %109 = vmatpush.bf16.msra.mxu0 0
    %110 = vmatpush.bf16.msra.mxu0 0
    %111 = vmatpush.bf16.msra.mxu0 0
    %112 = vmatpush.bf16.msra.mxu0 0
    %113 = vmatpush.bf16.msra.mxu0 %v100
    %114 = vmatpush.bf16.msra.mxu0 %v99
    %115 = vmatpush.bf16.msra.mxu0 %v98
    %116 = vmatpush.bf16.msra.mxu0 %v97
    %117 = vmatmul.bf16.gmra.mxu0 %v107
    %v118 = vpop.f32.mrf.mxu0
    %v119 = vadd.f32 %v79, %v118
    %v120 = vpop.f32.mrf.mxu0
    %121 = vdwg.mxu0
    %v122 = vmax.f32 %v119, 0.0
    %v123 = vpack.c.bf16 %v122, %v122
    %v124 = vld [vmem:[%s5] sm:$0xf]
    %v125 = vld [vmem:[%s5 + $0x4] sm:$0xf]
    %v126 = vld [vmem:[%s5 + $0x8] sm:$0xf]
    %v127 = vld [vmem:[%s5 + $0xc] sm:$0xf]
    %v128 = vld [vmem:[%s6] sm:$0x1]
    %v130 = vperm.slane %v128, 0
    %v136 = vunpack.c.l.b16 %v124
    %v137 = vunpack.c.l.b16 %v125
    %v138 = vunpack.c.l.b16 %v126
    %v139 = vunpack.c.l.b16 %v127
    %v140 = vpack.c.b16 %v137, %v136
    %v141 = vpack.c.b16 %v139, %v138
    %v145 = vsel %vm50, %v123, 0
    %147 = vmatpush.bf16.msra.mxu0 0
    %148 = vmatpush.bf16.msra.mxu0 0
    %149 = vmatpush.bf16.msra.mxu0 0
    %150 = vmatpush.bf16.msra.mxu0 0
    %151 = vmatpush.bf16.msra.mxu0 0
    %152 = vmatpush.bf16.msra.mxu0 0
    %153 = vmatpush.bf16.msra.mxu0 %v141
    %154 = vmatpush.bf16.msra.mxu0 %v140
    %155 = vmatmul.bf16.gmra.mxu0 %v145
    %v156 = vpop.f32.mrf.mxu0
    %v157 = vadd.f32 %v130, %v156
    %v158 = vpop.f32.mrf.mxu0
    %159 = vdwg.mxu0
    %160 = vst [vmem:[#allocation2] sm:$0xff] %v157
    // Predicated region
    $region30: #{tpu_custom_call.1} parent=1 // pred_check
      _
    $region31: #{tpu_custom_call.1} parent=1 // pred_check_branch
      %162 = sbr.rel (0) target = $region33
    $region32: #{tpu_custom_call.1} parent=1 // pred_region
      %164 = vsyncadd [#allocation3], 0
      %s166 = sshll.u32 [#allocation2], 4
      %s167 = int_to_ptr.vmem [resolvable:$true] %s166
      %s168 = sshll.u32 %s7, 4
      %s169 = int_to_ptr.hbm [resolvable:$true] %s168
      %171 = dma.vmem_to_hbm [thread:$0]  %s167, 128, %s169, [#allocation3]
    $region33: #{tpu_custom_call.1} parent=1 // pred_fallthru
      _
    // Predicated region
    $region34: #{tpu_custom_call.1} parent=1 // pred_check
      _
    $region35: #{tpu_custom_call.1} parent=1 // pred_check_branch
      %173 = sbr.rel (0) target = $region37
    $region36: #{tpu_custom_call.1} parent=1 // pred_region
      %175 = dma.done [#allocation3], 128
    $region37: #{tpu_custom_call.1} parent=1 // pred_fallthru
      _
    %176 = vsyncpa [#allocation3], 1

</llo_original>
